<compile_context>
chip_gen: v5e
topology: v5e:2x2
jax: 0.10.0
libtpu: 0.0.40
codegen_flags: <defaults>
</compile_context>

<pallas_src>
from typing import NamedTuple, Optional

import jax
import jax.numpy as jnp
from jax.experimental import pallas as pl
from jax.experimental.pallas import tpu as pltpu


class EmbedReturn(NamedTuple):
    emb: Optional[jax.Array] = None
    time_emb: Optional[jax.Array] = None
    style: Optional[jax.Array] = None
    style_other: Optional[jax.Array] = None


def _round_up(x: int, m: int) -> int:
    return ((x + m - 1) // m) * m


def _pad2d(a, rows: int, cols: int, dtype=None):
    """Zero-pad a 2-D array up to (rows, cols), optionally casting."""
    dt = dtype if dtype is not None else a.dtype
    out = jnp.zeros((rows, cols), dt)
    return out.at[: a.shape[0], : a.shape[1]].set(a.astype(dt))


def _time_embed_kernel(x_ref, w1_ref, b1_ref, w2_ref, b2_ref, o_ref):
    # h = silu(x @ W1 + b1)      -- bf16 operands, f32 accumulation on the MXU
    h = jnp.dot(x_ref[...], w1_ref[...], preferred_element_type=jnp.float32)
    h = h + b1_ref[...]                       # b1 is [1, Np] f32, broadcasts over batch
    h = h * jax.nn.sigmoid(h)                 # SiLU in f32 (sigmoid lands on the EUP)
    # out = h @ W2 + b2          -- cast hidden to bf16 only for the MXU feed
    out = jnp.dot(h.astype(w2_ref.dtype), w2_ref[...],
                  preferred_element_type=jnp.float32)
    out = out + b2_ref[...]
    o_ref[...] = out.astype(o_ref.dtype)


def time_embed_pallas(x, w1, b1, w2, b2, *, block_b: int = 128):
    """x: [B, C_in] -> [B, C_out] via Linear -> SiLU -> Linear in one Pallas kernel.

    Weights w1:[C_in,C_out], w2:[C_out,C_out] (any float dtype; cast to bf16),
    biases b1,b2:[C_out] (kept f32).  Feature dims are padded to multiples of
    128 (lane-dense loads/stores), the batch axis is tiled and run in parallel.
    """
    B, C_in = x.shape
    C_out = w1.shape[1]
    out_dtype = x.dtype

    # Lane-dense padded feature dims; zero padding is exact for this MLP
    # (padded W1/W2 columns & b1/b2 entries are zero -> silu(0)=0 -> no leakage).
    Kp = _round_up(C_in, 128)
    Np = _round_up(C_out, 128)

    # Batch tiling (sublane-aligned).  Small batches -> one grid step; big
    # batches -> grid of parallel steps that both v7x TensorCores can share.
    TB = min(block_b, _round_up(B, 8))
    Bp = _round_up(B, TB)
    grid = (Bp // TB,)

    x_p = _pad2d(x, Bp, Kp, jnp.bfloat16)
    w1_p = _pad2d(w1, Kp, Np, jnp.bfloat16)
    w2_p = _pad2d(w2, Np, Np, jnp.bfloat16)
    b1_p = _pad2d(b1.reshape(1, -1), 1, Np, jnp.float32)
    b2_p = _pad2d(b2.reshape(1, -1), 1, Np, jnp.float32)

    cost = pl.CostEstimate(
        flops=2 * B * C_in * C_out + 2 * B * C_out * C_out,
        transcendentals=B * C_out,
        bytes_accessed=(B * C_in * 2 + C_in * C_out * 2 + C_out * C_out * 2
                        + 2 * C_out * 4 + B * C_out * 4),
    )

    out_p = pl.pallas_call(
        _time_embed_kernel,
        out_shape=jax.ShapeDtypeStruct((Bp, Np), out_dtype),
        grid_spec=pltpu.PrefetchScalarGridSpec(
            num_scalar_prefetch=0,
            grid=grid,
            in_specs=[
                pl.BlockSpec((TB, Kp), lambda i: (i, 0)),   # x tile (batch-tiled)
                pl.BlockSpec((Kp, Np), lambda i: (0, 0)),   # W1 (constant across grid)
                pl.BlockSpec((1, Np), lambda i: (0, 0)),    # b1
                pl.BlockSpec((Np, Np), lambda i: (0, 0)),   # W2
                pl.BlockSpec((1, Np), lambda i: (0, 0)),    # b2
            ],
            out_specs=pl.BlockSpec((TB, Np), lambda i: (i, 0)),
        ),
        compiler_params=pltpu.CompilerParams(
            dimension_semantics=("parallel",),
            vmem_limit_bytes=32 * 1024 * 1024,
        ),
        cost_estimate=cost,
    )(x_p, w1_p, b1_p, w2_p, b2_p)

    return out_p[:B, :C_out]


class TimeStyleSeperateEmbed:
    """JAX/Pallas port of TimeStyleSeperateEmbed."""

    def __init__(self, time_channels: int, time_out_channels: int, key=None):
        if key is None:
            key = jax.random.PRNGKey(0)
        k1, k2, k3, k4 = jax.random.split(key, 4)
        s1 = 1.0 / (time_channels ** 0.5)
        s2 = 1.0 / (time_out_channels ** 0.5)
        # Weights stored bf16 (MXU-native feed, half the weight DMA bytes);
        # biases stay f32 and are added to the f32 accumulator in-kernel.
        self.w1 = jax.random.uniform(k1, (time_channels, time_out_channels),
                                     jnp.float32, -s1, s1).astype(jnp.bfloat16)
        self.b1 = jax.random.uniform(k2, (time_out_channels,), jnp.float32, -s1, s1)
        self.w2 = jax.random.uniform(k3, (time_out_channels, time_out_channels),
                                     jnp.float32, -s2, s2).astype(jnp.bfloat16)
        self.b2 = jax.random.uniform(k4, (time_out_channels,), jnp.float32, -s2, s2)

    def __call__(self, time_emb=None, cond=None, cond_other=None, **kwargs):
        if time_emb is None:
            t_out = None
        else:
            t_out = time_embed_pallas(time_emb, self.w1, self.b1, self.w2, self.b2)
        style = cond                # nn.Identity
        if cond_other is not None:
            style = cond_other      # nn.Identity
        return EmbedReturn(emb=style, time_emb=t_out, style=style, style_other=style)


if __name__ == "__main__":
    key = jax.random.PRNGKey(0)
    k_param, k_t, k_c = jax.random.split(key, 3)

    time_channels = 32
    time_out_channels = 64
    batch = 8

    module = TimeStyleSeperateEmbed(time_channels, time_out_channels, key=k_param)

    time_emb = jax.random.normal(k_t, (batch, time_channels), jnp.float32)
    cond = jax.random.normal(k_c, (batch, time_out_channels), jnp.float32)

    out = module(time_emb=time_emb, cond=cond)
    jax.block_until_ready(out.time_emb)
    jax.block_until_ready(out.style)

    # Reference: same bf16-feed / f32-accumulate arithmetic as the kernel.
    w1f = module.w1.astype(jnp.float32)
    w2f = module.w2.astype(jnp.float32)
    xb = time_emb.astype(jnp.bfloat16).astype(jnp.float32)
    h_ref = xb @ w1f + module.b1
    h_ref = h_ref * jax.nn.sigmoid(h_ref)
    hb = h_ref.astype(jnp.bfloat16).astype(jnp.float32)
    ref = hb @ w2f + module.b2

    assert out.time_emb.shape == (batch, time_out_channels)
    assert out.time_emb.dtype == time_emb.dtype
    assert jnp.allclose(out.time_emb, ref, atol=2e-3, rtol=2e-3)
    assert out.style is cond and out.emb is cond and out.style_other is cond

    print("KERNEL_OK")
</pallas_src>

<mosaic_0001>
module attributes {stable_mosaic.version = 11 : i64} {
  func.func @_time_embed_kernel(%arg0: i32, %arg1: memref<8x128xbf16, #tpu.memory_space<vmem>>, %arg2: memref<128x128xbf16, #tpu.memory_space<vmem>>, %arg3: memref<1x128xf32, #tpu.memory_space<vmem>>, %arg4: memref<128x128xbf16, #tpu.memory_space<vmem>>, %arg5: memref<1x128xf32, #tpu.memory_space<vmem>>, %arg6: memref<8x128xf32, #tpu.memory_space<vmem>>) attributes {dimension_semantics = [#tpu.dimension_semantics<parallel>], iteration_bounds = array<i64: 1>, scalar_prefetch = 0 : i64, scratch_operands = 0 : i64, tpu.core_type = #tpu.core_type<tc>, window_params = [{transform_indices = @transform_0, window_bounds = array<i64: 8, 128>}, {pipeline_mode = #tpu.pipeline_mode<synchronous>, transform_indices = @transform_1, window_bounds = array<i64: 128, 128>}, {pipeline_mode = #tpu.pipeline_mode<synchronous>, transform_indices = @transform_2, window_bounds = array<i64: 1, 128>}, {pipeline_mode = #tpu.pipeline_mode<synchronous>, transform_indices = @transform_3, window_bounds = array<i64: 128, 128>}, {pipeline_mode = #tpu.pipeline_mode<synchronous>, transform_indices = @transform_4, window_bounds = array<i64: 1, 128>}, {transform_indices = @transform_5, window_bounds = array<i64: 8, 128>}]} {
    %c0 = arith.constant 0 : index
    %c0_0 = arith.constant 0 : index
    %0 = vector.load %arg1[%c0, %c0_0] : memref<8x128xbf16, #tpu.memory_space<vmem>>, vector<8x128xbf16>
    %c0_1 = arith.constant 0 : index
    %c0_2 = arith.constant 0 : index
    %1 = vector.load %arg2[%c0_1, %c0_2] : memref<128x128xbf16, #tpu.memory_space<vmem>>, vector<128x128xbf16>
    %cst = arith.constant dense<0.000000e+00> : vector<8x128xf32>
    %2 = tpu.matmul %0, %1, %cst {dimension_numbers = #tpu.dot_dimension_numbers<[1], [0], [0], [1], [0, 0, 1, 1], [], []>} : vector<8x128xbf16>, vector<128x128xbf16>, vector<8x128xf32> -> vector<8x128xf32>
    %c0_3 = arith.constant 0 : index
    %c0_4 = arith.constant 0 : index
    %3 = vector.load %arg3[%c0_3, %c0_4] : memref<1x128xf32, #tpu.memory_space<vmem>>, vector<1x128xf32>
    %4 = vector.broadcast %3 : vector<1x128xf32> to vector<8x128xf32>
    %5 = arith.addf %2, %4 : vector<8x128xf32>
    %6 = arith.negf %5 : vector<8x128xf32>
    %7 = math.exp %6 : vector<8x128xf32>
    %cst_5 = arith.constant 1.000000e+00 : f32
    %8 = vector.broadcast %cst_5 : f32 to vector<8x128xf32>
    %9 = arith.addf %8, %7 : vector<8x128xf32>
    %10 = arith.divf %8, %9 : vector<8x128xf32>
    %11 = arith.mulf %5, %10 : vector<8x128xf32>
    %12 = arith.truncf %11 : vector<8x128xf32> to vector<8x128xbf16>
    %c0_6 = arith.constant 0 : index
    %c0_7 = arith.constant 0 : index
    %13 = vector.load %arg4[%c0_6, %c0_7] : memref<128x128xbf16, #tpu.memory_space<vmem>>, vector<128x128xbf16>
    %cst_8 = arith.constant dense<0.000000e+00> : vector<8x128xf32>
    %14 = tpu.matmul %12, %13, %cst_8 {dimension_numbers = #tpu.dot_dimension_numbers<[1], [0], [0], [1], [0, 0, 1, 1], [], []>} : vector<8x128xbf16>, vector<128x128xbf16>, vector<8x128xf32> -> vector<8x128xf32>
    %c0_9 = arith.constant 0 : index
    %c0_10 = arith.constant 0 : index
    %15 = vector.load %arg5[%c0_9, %c0_10] : memref<1x128xf32, #tpu.memory_space<vmem>>, vector<1x128xf32>
    %16 = vector.broadcast %15 : vector<1x128xf32> to vector<8x128xf32>
    %17 = arith.addf %14, %16 : vector<8x128xf32>
    %c0_11 = arith.constant 0 : index
    %c0_12 = arith.constant 0 : index
    %18 = vector.load %arg6[%c0_11, %c0_12] : memref<8x128xf32, #tpu.memory_space<vmem>>, vector<8x128xf32>
    tpu.vector_store %arg6[%c0_11, %c0_12], %17 {strides = array<i32>} : memref<8x128xf32, #tpu.memory_space<vmem>>, vector<8x128xf32>,
    return
  }
  func.func @transform_0(%arg0: i32) -> (i32, i32) {
    %c0_i32 = arith.constant 0 : i32
    %c0_i32_0 = arith.constant 0 : i32
    return %arg0, %c0_i32 : i32, i32
  }
  func.func @transform_1(%arg0: i32) -> (i32, i32) {
    %c0_i32 = arith.constant 0 : i32
    %c0_i32_0 = arith.constant 0 : i32
    %c0_i32_1 = arith.constant 0 : i32
    return %c0_i32, %c0_i32_0 : i32, i32
  }
  func.func @transform_2(%arg0: i32) -> (i32, i32) {
    %c0_i32 = arith.constant 0 : i32
    %c0_i32_0 = arith.constant 0 : i32
    %c0_i32_1 = arith.constant 0 : i32
    return %c0_i32, %c0_i32_0 : i32, i32
  }
  func.func @transform_3(%arg0: i32) -> (i32, i32) {
    %c0_i32 = arith.constant 0 : i32
    %c0_i32_0 = arith.constant 0 : i32
    %c0_i32_1 = arith.constant 0 : i32
    return %c0_i32, %c0_i32_0 : i32, i32
  }
  func.func @transform_4(%arg0: i32) -> (i32, i32) {
    %c0_i32 = arith.constant 0 : i32
    %c0_i32_0 = arith.constant 0 : i32
    %c0_i32_1 = arith.constant 0 : i32
    return %c0_i32, %c0_i32_0 : i32, i32
  }
  func.func @transform_5(%arg0: i32) -> (i32, i32) {
    %c0_i32 = arith.constant 0 : i32
    %c0_i32_0 = arith.constant 0 : i32
    return %arg0, %c0_i32 : i32, i32
  }
}

</mosaic_0001>

<llo_original>
// kernel: tpu_custom_call.1
$region0: #{tpu_custom_call.1}
  #allocation0 [shape = 'u32[]', space=smem, size = 0x4, offset = 0x4, fixed_abs, tag = 'smem constant byte address 0x4 - core index']
  #allocation1 [shape = 'u32[72,128]{1,0:T(1,128)}', space=vmem, size = 0x9000, scoped, tag = 'internal scratch']
  %s0 = inlined_call_operand.hbm [shape: bf16[8,128], index: 0, kind: input, shape index: {}]
  %s1 = inlined_call_operand.hbm [shape: bf16[128,128], index: 1, kind: input, shape index: {}]
  %s2 = inlined_call_operand.vmem [shape: f32[1,128], index: 2, kind: input, shape index: {}]
  %s3 = inlined_call_operand.hbm [shape: bf16[128,128], index: 3, kind: input, shape index: {}]
  %s4 = inlined_call_operand.vmem [shape: f32[1,128], index: 4, kind: input, shape index: {}]
  %s5 = inlined_call_operand.hbm [shape: f32[8,128], index: 5, kind: output, shape index: {}]
  %s6 = sld [smem:[#allocation0]]
  $region42: #{tpu_custom_call.1} parent=0
    _
  %s8 = ssub.s32 1, %s6
  %s9 = scalar_select 0, %s8, %s6
  $region1: #{tpu_custom_call.1} parent=0
    #allocation2 [shape = 'u8[2048]{0}', space=vmem, size = 0x800, scoped, tag = 'input window, operand 0, single buffered']
    #allocation3 [shape = 's32[1]{0}', space=sflag, size = 0x4, scoped, tag = 'scoped memory for tpu_custom_call.1']
    #allocation4 [shape = 's32[1]{0}', space=sflag, size = 0x4, scoped, tag = 'scoped memory for tpu_custom_call.1']
    #allocation5 [shape = 'u8[32768]{0}', space=vmem, size = 0x8000, scoped, tag = 'input window, operand 1, single buffered']
    #allocation6 [shape = 's32[1]{0}', space=sflag, size = 0x4, scoped, tag = 'scoped memory for tpu_custom_call.1']
    #allocation7 [shape = 'u8[32768]{0}', space=vmem, size = 0x8000, scoped, tag = 'input window, operand 3, single buffered']
    #allocation8 [shape = 'u8[4096]{0}', space=vmem, size = 0x1000, scoped, tag = 'output window, operand 0, single buffered']
    %10 = vsyncpa [#allocation3], 0
    %11 = vsyncpa [#allocation6], 0
    %12 = vsyncpa [#allocation4], 0
    // Predicated region
    $region2: #{tpu_custom_call.1} parent=1 // pred_check
      _
    $region3: #{tpu_custom_call.1} parent=1 // pred_check_branch
      %14 = sbr.rel (0) target = $region5
    $region4: #{tpu_custom_call.1} parent=1 // pred_region
      %16 = vsyncadd [#allocation3], 0
      %s18 = sshll.u32 %s0, 4
      %s19 = int_to_ptr.hbm [resolvable:$true] %s18
      %s20 = sshll.u32 [#allocation2], 4
      %s21 = int_to_ptr.vmem [resolvable:$true] %s20
      %23 = dma.hbm_to_vmem [thread:$0]  %s19, 64, %s21, [#allocation3]
    $region5: #{tpu_custom_call.1} parent=1 // pred_fallthru
      _
    // Predicated region
    $region6: #{tpu_custom_call.1} parent=1 // pred_check
      _
    $region7: #{tpu_custom_call.1} parent=1 // pred_check_branch
      %25 = sbr.rel (0) target = $region9
    $region8: #{tpu_custom_call.1} parent=1 // pred_region
      %27 = vsyncadd [#allocation6], 0
      %s28 = sshll.u32 %s1, 4
      %s29 = int_to_ptr.hbm [resolvable:$true] %s28
      %s30 = sshll.u32 [#allocation5], 4
      %s31 = int_to_ptr.vmem [resolvable:$true] %s30
      %36 = dma.hbm_to_vmem [thread:$0]  %s29, 1024, %s31, [#allocation6], 64, 64, 4
    $region9: #{tpu_custom_call.1} parent=1 // pred_fallthru
      _
    // Predicated region
    $region10: #{tpu_custom_call.1} parent=1 // pred_check
      _
    $region11: #{tpu_custom_call.1} parent=1 // pred_check_branch
      %38 = sbr.rel (0) target = $region13
    $region12: #{tpu_custom_call.1} parent=1 // pred_region
      _
    $region13: #{tpu_custom_call.1} parent=1 // pred_fallthru
      _
    // Predicated region
    $region14: #{tpu_custom_call.1} parent=1 // pred_check
      _
    $region15: #{tpu_custom_call.1} parent=1 // pred_check_branch
      %40 = sbr.rel (0) target = $region17
    $region16: #{tpu_custom_call.1} parent=1 // pred_region
      %42 = vsyncadd [#allocation6], 0
      %s43 = sshll.u32 %s3, 4
      %s44 = int_to_ptr.hbm [resolvable:$true] %s43
      %s45 = sshll.u32 [#allocation7], 4
      %s46 = int_to_ptr.vmem [resolvable:$true] %s45
      %51 = dma.hbm_to_vmem [thread:$0]  %s44, 1024, %s46, [#allocation6], 64, 64, 4
    $region17: #{tpu_custom_call.1} parent=1 // pred_fallthru
      _
    // Predicated region
    $region18: #{tpu_custom_call.1} parent=1 // pred_check
      _
    $region19: #{tpu_custom_call.1} parent=1 // pred_check_branch
      %53 = sbr.rel (0) target = $region21
    $region20: #{tpu_custom_call.1} parent=1 // pred_region
      _
    $region21: #{tpu_custom_call.1} parent=1 // pred_fallthru
      _
    // Predicated region
    $region22: #{tpu_custom_call.1} parent=1 // pred_check
      _
    $region23: #{tpu_custom_call.1} parent=1 // pred_check_branch
      %55 = sbr.rel (0) target = $region25
    $region24: #{tpu_custom_call.1} parent=1 // pred_region
      %57 = dma.done [#allocation3], 64
    $region25: #{tpu_custom_call.1} parent=1 // pred_fallthru
      _
    // Predicated region
    $region26: #{tpu_custom_call.1} parent=1 // pred_check
      _
    $region27: #{tpu_custom_call.1} parent=1 // pred_check_branch
      %59 = sbr.rel (0) target = $region29
    $region28: #{tpu_custom_call.1} parent=1 // pred_region
      %61 = dma.done [#allocation6], 1024
    $region29: #{tpu_custom_call.1} parent=1 // pred_fallthru
      _
    // Predicated region
    $region30: #{tpu_custom_call.1} parent=1 // pred_check
      _
    $region31: #{tpu_custom_call.1} parent=1 // pred_check_branch
      %63 = sbr.rel (0) target = $region33
    $region32: #{tpu_custom_call.1} parent=1 // pred_region
      %65 = dma.done [#allocation6], 1024
    $region33: #{tpu_custom_call.1} parent=1 // pred_fallthru
      _
    %v66 = vld [vmem:[#allocation2] sm:$0xf]
    %v67 = vld [vmem:[#allocation5] sm:$0xf]
    %v68 = vld [vmem:[#allocation5 + $0x4] sm:$0xf]
    %v69 = vld [vmem:[#allocation5 + $0x8] sm:$0xf]
    %v70 = vld [vmem:[#allocation5 + $0xc] sm:$0xf]
    %v71 = vld [vmem:[#allocation5 + $0x10] sm:$0xf]
    %v72 = vld [vmem:[#allocation5 + $0x14] sm:$0xf]
    %v73 = vld [vmem:[#allocation5 + $0x18] sm:$0xf]
    %v74 = vld [vmem:[#allocation5 + $0x1c] sm:$0xf]
    %v75 = vld [vmem:[#allocation5 + $0x20] sm:$0xf]
    %v76 = vld [vmem:[#allocation5 + $0x24] sm:$0xf]
    %v77 = vld [vmem:[#allocation5 + $0x28] sm:$0xf]
    %v78 = vld [vmem:[#allocation5 + $0x2c] sm:$0xf]
    %v79 = vld [vmem:[#allocation5 + $0x30] sm:$0xf]
    %v80 = vld [vmem:[#allocation5 + $0x34] sm:$0xf]
    %v81 = vld [vmem:[#allocation5 + $0x38] sm:$0xf]
    %v82 = vld [vmem:[#allocation5 + $0x3c] sm:$0xf]
    %v83 = vld [vmem:[%s2] sm:$0x1]
    %v85 = vperm.slane %v83, 0
    %v103 = vunpack.c.l.b16 %v67
    %v104 = vunpack.c.l.b16 %v68
    %v105 = vunpack.c.l.b16 %v69
    %v106 = vunpack.c.l.b16 %v70
    %v107 = vunpack.c.l.b16 %v71
    %v108 = vunpack.c.l.b16 %v72
    %v109 = vunpack.c.l.b16 %v73
    %v110 = vunpack.c.l.b16 %v74
    %v111 = vunpack.c.l.b16 %v75
    %v112 = vunpack.c.l.b16 %v76
    %v113 = vunpack.c.l.b16 %v77
    %v114 = vunpack.c.l.b16 %v78
    %v115 = vunpack.c.l.b16 %v79
    %v116 = vunpack.c.l.b16 %v80
    %v117 = vunpack.c.l.b16 %v81
    %v118 = vunpack.c.l.b16 %v82
    %v119 = vpack.c.b16 %v104, %v103
    %v120 = vpack.c.b16 %v106, %v105
    %v121 = vpack.c.b16 %v108, %v107
    %v122 = vpack.c.b16 %v110, %v109
    %v123 = vpack.c.b16 %v112, %v111
    %v124 = vpack.c.b16 %v114, %v113
    %v125 = vpack.c.b16 %v116, %v115
    %v126 = vpack.c.b16 %v118, %v117
    %135 = vmatpush.bf16.msra.mxu0 %v126
    %136 = vmatpush.bf16.msra.mxu0 %v125
    %137 = vmatpush.bf16.msra.mxu0 %v124
    %138 = vmatpush.bf16.msra.mxu0 %v123
    %139 = vmatpush.bf16.msra.mxu0 %v122
    %140 = vmatpush.bf16.msra.mxu0 %v121
    %141 = vmatpush.bf16.msra.mxu0 %v120
    %142 = vmatpush.bf16.msra.mxu0 %v119
    %143 = vmatmul.bf16.gmra.mxu0 %v66
    %v144 = vpop.f32.mrf.mxu0
    %v145 = vadd.f32 %v85, %v144
    %v146 = vpop.f32.mrf.mxu0
    %147 = vdwg.mxu0
    %v148 = vxor.u32 %v145, 2147483648
    %v149 = vmul.f32 %v148, 1.442695
    %v150 = vpow.pop %v149
    %v151 = vadd.f32 %v150, 1.0
    %v152 = vrcp.pop %v151
    %v153 = vmul.f32 %v151, %v152
    %v154 = vsub.f32 1.0, %v153
    %v155 = vmul.f32 %v152, %v154
    %v156 = vadd.f32 %v152, %v155
    %vm157 = vweird.f32 %v151
    %vm158 = vweird.f32 %v152
    %vm159 = vmor %vm157, %vm158
    %v160 = vsel %vm159, %v152, %v156
    %v161 = vand.u32 2147483647, %v151
    %vm162 = vcmp.eq.f32.partialorder %v161, 8.507059e+37
    %v163 = vand.u32 %v151, 2147483648
    %v164 = vor.u32 1.1754944e-38, %v163
    %v165 = vsel %vm162, %v164, %v160
    %v166 = vmul.f32 1.0, %v165
    %v167 = vmul.f32 %v145, %v166
    %v168 = vpack.c.bf16 %v167, %v167
    %v169 = vld [vmem:[#allocation7] sm:$0xf]
    %v170 = vld [vmem:[#allocation7 + $0x4] sm:$0xf]
    %v171 = vld [vmem:[#allocation7 + $0x8] sm:$0xf]
    %v172 = vld [vmem:[#allocation7 + $0xc] sm:$0xf]
    %v173 = vld [vmem:[#allocation7 + $0x10] sm:$0xf]
    %v174 = vld [vmem:[#allocation7 + $0x14] sm:$0xf]
    %v175 = vld [vmem:[#allocation7 + $0x18] sm:$0xf]
    %v176 = vld [vmem:[#allocation7 + $0x1c] sm:$0xf]
    %v177 = vld [vmem:[#allocation7 + $0x20] sm:$0xf]
    %v178 = vld [vmem:[#allocation7 + $0x24] sm:$0xf]
    %v179 = vld [vmem:[#allocation7 + $0x28] sm:$0xf]
    %v180 = vld [vmem:[#allocation7 + $0x2c] sm:$0xf]
    %v181 = vld [vmem:[#allocation7 + $0x30] sm:$0xf]
    %v182 = vld [vmem:[#allocation7 + $0x34] sm:$0xf]
    %v183 = vld [vmem:[#allocation7 + $0x38] sm:$0xf]
    %v184 = vld [vmem:[#allocation7 + $0x3c] sm:$0xf]
    %v185 = vld [vmem:[%s4] sm:$0x1]
    %v187 = vperm.slane %v185, 0
    %v205 = vunpack.c.l.b16 %v169
    %v206 = vunpack.c.l.b16 %v170
    %v207 = vunpack.c.l.b16 %v171
    %v208 = vunpack.c.l.b16 %v172
    %v209 = vunpack.c.l.b16 %v173
    %v210 = vunpack.c.l.b16 %v174
    %v211 = vunpack.c.l.b16 %v175
    %v212 = vunpack.c.l.b16 %v176
    %v213 = vunpack.c.l.b16 %v177
    %v214 = vunpack.c.l.b16 %v178
    %v215 = vunpack.c.l.b16 %v179
    %v216 = vunpack.c.l.b16 %v180
    %v217 = vunpack.c.l.b16 %v181
    %v218 = vunpack.c.l.b16 %v182
    %v219 = vunpack.c.l.b16 %v183
    %v220 = vunpack.c.l.b16 %v184
    %v221 = vpack.c.b16 %v206, %v205
    %v222 = vpack.c.b16 %v208, %v207
    %v223 = vpack.c.b16 %v210, %v209
    %v224 = vpack.c.b16 %v212, %v211
    %v225 = vpack.c.b16 %v214, %v213
    %v226 = vpack.c.b16 %v216, %v215
    %v227 = vpack.c.b16 %v218, %v217
    %v228 = vpack.c.b16 %v220, %v219
    %237 = vmatpush.bf16.msra.mxu0 %v228
    %238 = vmatpush.bf16.msra.mxu0 %v227
    %239 = vmatpush.bf16.msra.mxu0 %v226
    %240 = vmatpush.bf16.msra.mxu0 %v225
    %241 = vmatpush.bf16.msra.mxu0 %v224
    %242 = vmatpush.bf16.msra.mxu0 %v223
    %243 = vmatpush.bf16.msra.mxu0 %v222
    %244 = vmatpush.bf16.msra.mxu0 %v221
    %245 = vmatmul.bf16.gmra.mxu0 %v168
    %v246 = vpop.f32.mrf.mxu0
    %v247 = vadd.f32 %v187, %v246
    %v248 = vpop.f32.mrf.mxu0
    %249 = vdwg.mxu0
    %250 = vst [vmem:[#allocation8] sm:$0xff] %v247
    // Predicated region
    $region34: #{tpu_custom_call.1} parent=1 // pred_check
      _
    $region35: #{tpu_custom_call.1} parent=1 // pred_check_branch
      %252 = sbr.rel (0) target = $region37
    $region36: #{tpu_custom_call.1} parent=1 // pred_region
      %254 = vsyncadd [#allocation4], 0
      %s256 = sshll.u32 [#allocation8], 4
      %s257 = int_to_ptr.vmem [resolvable:$true] %s256
      %s258 = sshll.u32 %s5, 4
      %s259 = int_to_ptr.hbm [resolvable:$true] %s258
      %261 = dma.vmem_to_hbm [thread:$0]  %s257, 128, %s259, [#allocation4]
    $region37: #{tpu_custom_call.1} parent=1 // pred_fallthru
      _
    // Predicated region
    $region38: #{tpu_custom_call.1} parent=1 // pred_check
      _
    $region39: #{tpu_custom_call.1} parent=1 // pred_check_branch
      %263 = sbr.rel (0) target = $region41
    $region40: #{tpu_custom_call.1} parent=1 // pred_region
      %265 = dma.done [#allocation4], 128
    $region41: #{tpu_custom_call.1} parent=1 // pred_fallthru
      _
    %266 = vsyncpa [#allocation3], 1
    %267 = vsyncpa [#allocation6], 1
    %268 = vsyncpa [#allocation4], 1

</llo_original>
